<compile_context>
chip_gen: v7x
topology: tpu7x:2x2x1
jax: 0.10.0
libtpu: 0.0.40
codegen_flags: <defaults>
</compile_context>

<pallas_src>
import jax
import jax.numpy as jnp
from jax import lax
from jax.experimental import pallas as pl
from jax.experimental.pallas import tpu as pltpu

_LANES = 128
_SUBLANES = 8
_MAX_TILE_ROWS = 4096   # 4096x128 f32 = 2 MiB per input block (v5e-safe)
_CHUNK_ROWS = 32        # register-resident chunk: 4 vregs per f32 value
_UNROLL = 8             # inner fori_loop unroll factor


def _round_up(x, m):
    return ((x + m - 1) // m) * m


def _pow_int(u, g):
    # small positive integer power via explicit multiplies (keeps EUP free)
    out = u
    for _ in range(g - 1):
        out = out * u
    return out


def _make_kernel(tile_rows, chunk_rows, num_blocks, n_valid, alpha, gamma,
                 binary_targets):
    """Build the kernel with static tiling / masking parameters baked in."""
    nrows_full = n_valid // _LANES     # rows that are fully valid
    rem = n_valid % _LANES             # valid lanes in row `nrows_full`
    tail_ragged = (num_blocks * tile_rows * _LANES) != n_valid
    n_chunks = tile_rows // chunk_rows
    acc_groups = chunk_rows // _SUBLANES
    unroll = min(_UNROLL, n_chunks)
    alpha = float(alpha)
    gamma = int(gamma)

    def _focal_chunk(x_raw, t_raw):
        x = x_raw.astype(jnp.float32)
        t = t_raw.astype(jnp.float32)
        e = jnp.exp(-jnp.abs(x))
        # Numerically-stable BCE with logits (matches torch's
        # binary_cross_entropy_with_logits, reduction='none'):
        #   bce = max(x, 0) - x * t + log1p(exp(-|x|))
        bce = jnp.maximum(x, 0.0) - x * t + jnp.log1p(e)
        if binary_targets:
            # For t in {0,1}: exp(-bce) == sigmoid(x) if t==1 else 1-sigmoid(x).
            # Replaces the second exp with an approx vrcp (EUP-bound v7x win).
            inv = pl.reciprocal(1.0 + e, approx=True)
            p = jnp.where(x >= 0.0, inv, e * inv)      # sigmoid(x)
            pt = jnp.where(t >= 0.5, p, 1.0 - p)
        else:
            pt = jnp.exp(-bce)
        u = 1.0 - pt
        return (alpha * bce) * _pow_int(u, gamma)

    def kernel(x_ref, t_ref, o_ref):
        i = pl.program_id(0)
        acc0 = jnp.zeros((acc_groups, _SUBLANES, _LANES), jnp.float32)

        def plain_body(c, acc):
            r0 = pl.multiple_of(c * chunk_rows, chunk_rows)
            f = _focal_chunk(x_ref[pl.ds(r0, chunk_rows), :],
                             t_ref[pl.ds(r0, chunk_rows), :])
            # (chunk_rows,128) -> (acc_groups,8,128): independent vreg adds.
            return acc + f.reshape(acc_groups, _SUBLANES, _LANES)

        def masked_body(c, acc):
            r0 = pl.multiple_of(c * chunk_rows, chunk_rows)
            f = _focal_chunk(x_ref[pl.ds(r0, chunk_rows), :],
                             t_ref[pl.ds(r0, chunk_rows), :])
            row = lax.broadcasted_iota(jnp.int32, (chunk_rows, _LANES), 0)
            col = lax.broadcasted_iota(jnp.int32, (chunk_rows, _LANES), 1)
            grow = i * tile_rows + r0 + row
            valid = (grow < nrows_full) | ((grow == nrows_full) & (col < rem))
            # Keep this a full `where` select (NOT a mask-multiply): the tail
            # block reads past the logical end of the input and any Inf/NaN
            # from that garbage must be fully discarded.
            f = jnp.where(valid, f, 0.0)
            return acc + f.reshape(acc_groups, _SUBLANES, _LANES)

        if tail_ragged:
            is_tail = i == num_blocks - 1

            @pl.when(is_tail)
            def _():
                acc = lax.fori_loop(0, n_chunks, masked_body, acc0,
                                    unroll=unroll)
                o_ref[...] = jnp.sum(acc, axis=0)

            @pl.when(jnp.logical_not(is_tail))
            def _():
                acc = lax.fori_loop(0, n_chunks, plain_body, acc0,
                                    unroll=unroll)
                o_ref[...] = jnp.sum(acc, axis=0)
        else:
            acc = lax.fori_loop(0, n_chunks, plain_body, acc0, unroll=unroll)
            o_ref[...] = jnp.sum(acc, axis=0)

    return kernel


def focal_loss(inputs, targets, *, alpha=0.25, gamma=3, binary_targets=False):
    """Pallas TPU focal loss.  inputs/targets: same shape (e.g. NCHW logits).

    binary_targets=True enables a faster path that is only valid when targets
    are exactly 0/1 (replaces one exp with an approximate reciprocal).
    """
    assert inputs.shape == targets.shape
    assert int(gamma) == gamma and gamma >= 1, "integer gamma >= 1 expected"

    n_valid = inputs.size
    x_flat = inputs.reshape(-1)
    t_flat = targets.reshape(-1)

    # Pad only when the flat length is not a lane multiple (fallback path);
    # the common contiguous case is a free metadata reshape.
    n_lanes = _round_up(n_valid, _LANES)
    if n_lanes != n_valid:
        x_flat = jnp.pad(x_flat, (0, n_lanes - n_valid))
        t_flat = jnp.pad(t_flat, (0, n_lanes - n_valid))

    n_rows = n_lanes // _LANES
    x2d = x_flat.reshape(n_rows, _LANES)
    t2d = t_flat.reshape(n_rows, _LANES)

    # Row alignment: 8 for 32-bit inputs, 16 if any input is 16-bit
    # (bf16/f16 hardware tiles are (16, 128)).
    min_item = min(x2d.dtype.itemsize, t2d.dtype.itemsize)
    row_align = max(_SUBLANES, 32 // max(1, min_item))

    # Aim for >= 2 blocks so "parallel" actually shards across both v7x
    # TensorCores, while keeping blocks as large as possible (mem-bound on
    # v5e/v6e wants big blocks to amortize the ~0.35us per-step overhead).
    if n_rows <= 2 * _MAX_TILE_ROWS:
        tile_rows = _round_up(max(1, (n_rows + 1) // 2), row_align)
    else:
        tile_rows = _MAX_TILE_ROWS
    chunk_rows = min(_CHUNK_ROWS, tile_rows)
    tile_rows = _round_up(tile_rows, chunk_rows)
    num_blocks = (n_rows + tile_rows - 1) // tile_rows

    kernel = _make_kernel(tile_rows, chunk_rows, num_blocks, n_valid,
                          alpha, gamma, binary_targets)

    # VMEM budget: 2 inputs x 2 pipeline buffers x block + small output/margin.
    in_itemsize = x2d.dtype.itemsize + t2d.dtype.itemsize
    block_bytes = tile_rows * _LANES * in_itemsize
    vmem_limit = min(int(2 * block_bytes + (8 << 20)), 48 << 20)

    cost = pl.CostEstimate(
        flops=14 * n_valid,
        transcendentals=(2 if binary_targets else 3) * n_valid,
        bytes_accessed=n_rows * _LANES * in_itemsize
        + num_blocks * _SUBLANES * _LANES * 4,
    )

    partials = pl.pallas_call(
        kernel,
        out_shape=jax.ShapeDtypeStruct((num_blocks * _SUBLANES, _LANES),
                                       jnp.float32),
        grid=(num_blocks,),
        in_specs=[
            pl.BlockSpec((tile_rows, _LANES), lambda i: (i, 0)),
            pl.BlockSpec((tile_rows, _LANES), lambda i: (i, 0)),
        ],
        out_specs=pl.BlockSpec((_SUBLANES, _LANES), lambda i: (i, 0)),
        compiler_params=pltpu.CompilerParams(
            dimension_semantics=("parallel",),
            vmem_limit_bytes=vmem_limit,
        ),
        cost_estimate=cost,
    )(x2d, t2d)

    # Tiny final reduction + mean outside the kernel.
    return jnp.sum(partials) / jnp.float32(n_valid)


def _focal_loss_ref(inputs, targets, alpha=0.25, gamma=3):
    x = inputs.astype(jnp.float32)
    t = targets.astype(jnp.float32)
    bce = jnp.maximum(x, 0.0) - x * t + jnp.log1p(jnp.exp(-jnp.abs(x)))
    pt = jnp.exp(-bce)
    return jnp.mean(alpha * (1.0 - pt) ** gamma * bce)


if __name__ == "__main__":
    key = jax.random.PRNGKey(0)
    k1, k2, k3, k4, k5, k6 = jax.random.split(key, 6)

    # 1) Primary case: NCHW f32 logits, soft targets in [0,1] (2048 elements;
    #    lane-multiple -> no pad; split into 2 blocks so both v7x TCs work).
    x = jax.random.normal(k1, (2, 4, 16, 16), dtype=jnp.float32)
    t = jax.random.uniform(k2, (2, 4, 16, 16), dtype=jnp.float32)
    loss = focal_loss(x, t)
    jax.block_until_ready(loss)
    ref = _focal_loss_ref(x, t)
    assert jnp.allclose(loss, ref, rtol=1e-5, atol=1e-6), (loss, ref)

    # 2) Ragged case: size 1155 (not a multiple of 128) -> exercises the
    #    masked tail-block path and OOB block rows.
    x2 = jax.random.normal(k3, (3, 5, 7, 11), dtype=jnp.float32)
    t2 = jax.random.uniform(k4, (3, 5, 7, 11), dtype=jnp.float32)
    loss2 = focal_loss(x2, t2)
    jax.block_until_ready(loss2)
    ref2 = _focal_loss_ref(x2, t2)
    assert jnp.allclose(loss2, ref2, rtol=1e-5, atol=1e-6), (loss2, ref2)

    # 3) bf16-input path (half the HBM bytes; math still f32 in-kernel).
    x3 = jax.random.normal(k5, (2, 4, 32, 32), dtype=jnp.float32).astype(jnp.bfloat16)
    t3 = jax.random.uniform(k6, (2, 4, 32, 32), dtype=jnp.float32).astype(jnp.bfloat16)
    loss3 = focal_loss(x3, t3)
    jax.block_until_ready(loss3)
    ref3 = _focal_loss_ref(x3, t3)
    assert jnp.allclose(loss3, ref3, rtol=1e-5, atol=1e-6), (loss3, ref3)

    # 4) Binary-target fast path (opt-in; v7x EUP reduction). Approx
    #    reciprocal -> slightly looser tolerance.
    tb = (jax.random.uniform(k2, (2, 4, 16, 16)) > 0.5).astype(jnp.float32)
    loss4 = focal_loss(x, tb, binary_targets=True)
    jax.block_until_ready(loss4)
    ref4 = _focal_loss_ref(x, tb)
    assert jnp.allclose(loss4, ref4, rtol=5e-3, atol=1e-5), (loss4, ref4)

    print("KERNEL_OK")
</pallas_src>

<mosaic_0001>
module attributes {stable_mosaic.version = 11 : i64} {
  func.func @kernel(%arg0: i32, %arg1: memref<8x128xf32, #tpu.memory_space<vmem>>, %arg2: memref<8x128xf32, #tpu.memory_space<vmem>>, %arg3: memref<8x128xf32, #tpu.memory_space<vmem>>) attributes {dimension_semantics = [#tpu.dimension_semantics<parallel>], iteration_bounds = array<i64: 2>, scalar_prefetch = 0 : i64, scratch_operands = 0 : i64, tpu.core_type = #tpu.core_type<tc>, window_params = [{transform_indices = @transform_0, window_bounds = array<i64: 8, 128>}, {transform_indices = @transform_1, window_bounds = array<i64: 8, 128>}, {transform_indices = @transform_2, window_bounds = array<i64: 8, 128>}]} {
    %cst = arith.constant 0.000000e+00 : f32
    %0 = vector.broadcast %cst : f32 to vector<1x8x128xf32>
    %c0_i32 = arith.constant 0 : i32
    %c8_i32 = arith.constant 8 : i32
    %1 = arith.muli %c0_i32, %c8_i32 : i32
    %2 = tpu.assume_multiple %1, 8 : i32
    %3 = arith.index_cast %2 : i32 to index
    %c0 = arith.constant 0 : index
    %4 = vector.load %arg1[%3, %c0] : memref<8x128xf32, #tpu.memory_space<vmem>>, vector<8x128xf32>
    %5 = arith.index_cast %2 : i32 to index
    %c0_0 = arith.constant 0 : index
    %6 = vector.load %arg2[%5, %c0_0] : memref<8x128xf32, #tpu.memory_space<vmem>>, vector<8x128xf32>
    %7 = math.absf %4 : vector<8x128xf32>
    %cst_1 = arith.constant 0.000000e+00 : f32
    %8 = vector.broadcast %cst_1 : f32 to vector<8x128xf32>
    %9 = arith.subf %8, %7 : vector<8x128xf32>
    %10 = math.exp %9 : vector<8x128xf32>
    %cst_2 = arith.constant 0.000000e+00 : f32
    %11 = vector.broadcast %cst_2 : f32 to vector<8x128xf32>
    %12 = arith.maximumf %4, %11 : vector<8x128xf32>
    %13 = arith.mulf %4, %6 : vector<8x128xf32>
    %14 = arith.subf %12, %13 : vector<8x128xf32>
    %15 = math.log1p %10 : vector<8x128xf32>
    %16 = arith.addf %14, %15 : vector<8x128xf32>
    %cst_3 = arith.constant 0.000000e+00 : f32
    %17 = vector.broadcast %cst_3 : f32 to vector<8x128xf32>
    %18 = arith.subf %17, %16 : vector<8x128xf32>
    %19 = math.exp %18 : vector<8x128xf32>
    %cst_4 = arith.constant 1.000000e+00 : f32
    %20 = vector.broadcast %cst_4 : f32 to vector<8x128xf32>
    %21 = arith.subf %20, %19 : vector<8x128xf32>
    %cst_5 = arith.constant 2.500000e-01 : f32
    %22 = vector.broadcast %cst_5 : f32 to vector<8x128xf32>
    %23 = arith.mulf %22, %16 : vector<8x128xf32>
    %24 = arith.mulf %21, %21 : vector<8x128xf32>
    %25 = arith.mulf %24, %21 : vector<8x128xf32>
    %26 = arith.mulf %23, %25 : vector<8x128xf32>
    %27 = vector.shape_cast %26 : vector<8x128xf32> to vector<1x8x128xf32>
    %28 = arith.addf %0, %27 : vector<1x8x128xf32>
    %c1_i32 = arith.constant 1 : i32
    %cst_6 = arith.constant dense<0.000000e+00> : vector<8x128xf32>
    %29 = vector.multi_reduction <add>, %28, %cst_6 [0] : vector<1x8x128xf32> to vector<8x128xf32>
    %c0_7 = arith.constant 0 : index
    %c0_8 = arith.constant 0 : index
    %30 = vector.load %arg3[%c0_7, %c0_8] : memref<8x128xf32, #tpu.memory_space<vmem>>, vector<8x128xf32>
    tpu.vector_store %arg3[%c0_7, %c0_8], %29 {strides = array<i32>} : memref<8x128xf32, #tpu.memory_space<vmem>>, vector<8x128xf32>,
    return
  }
  func.func @transform_0(%arg0: i32) -> (i32, i32) {
    %c0_i32 = arith.constant 0 : i32
    %c0_i32_0 = arith.constant 0 : i32
    return %arg0, %c0_i32 : i32, i32
  }
  func.func @transform_1(%arg0: i32) -> (i32, i32) {
    %c0_i32 = arith.constant 0 : i32
    %c0_i32_0 = arith.constant 0 : i32
    return %arg0, %c0_i32 : i32, i32
  }
  func.func @transform_2(%arg0: i32) -> (i32, i32) {
    %c0_i32 = arith.constant 0 : i32
    %c0_i32_0 = arith.constant 0 : i32
    return %arg0, %c0_i32 : i32, i32
  }
}

</mosaic_0001>

<llo_original>
// kernel: tpu_custom_call.1
$region0: #{tpu_custom_call.1}
  #allocation0 [shape = 'u32[]', space=smem, size = 0x4, offset = 0x4, fixed_abs, tag = 'smem constant byte address 0x4 - core index']
  #allocation1 [shape = 'u32[144,128]{1,0:T(1,128)}', space=vmem, size = 0x12000, scoped, tag = 'internal scratch']
  %s0 = inlined_call_operand.hbm [shape: f32[16,128], index: 0, kind: input, shape index: {}]
  %s1 = inlined_call_operand.hbm [shape: f32[16,128], index: 1, kind: input, shape index: {}]
  %s2 = inlined_call_operand.hbm [shape: f32[16,128], index: 2, kind: output, shape index: {}]
  %s3 = sld [smem:[#allocation0]]
  $region49: #{tpu_custom_call.1} parent=0
    _
  %s5 = ssub.s32 1, %s3
  %s6 = scalar_select 0, %s5, %s3
  $region1: #{tpu_custom_call.1} parent=0
    #allocation2 [shape = 'u8[8192]{0}', space=vmem, size = 0x2000, scoped, tag = 'input window, operand 0']
    #allocation3 [shape = 's32[2]{0}', space=sflag, size = 0x8, scoped, tag = 'scoped memory for tpu_custom_call.1']
    #allocation4 [shape = 's32[2]{0}', space=sflag, size = 0x8, scoped, tag = 'scoped memory for tpu_custom_call.1']
    #allocation5 [shape = 'u8[8192]{0}', space=vmem, size = 0x2000, scoped, tag = 'input window, operand 1']
    #allocation6 [shape = 's32[2]{0}', space=sflag, size = 0x8, scoped, tag = 'scoped memory for tpu_custom_call.1']
    #allocation7 [shape = 'u8[8192]{0}', space=vmem, size = 0x2000, scoped, tag = 'output window, operand 0']
    %7 = vsyncpa [#allocation3], 0
    %s8 = scalar_lea.sflag [#allocation3], 1
    %9 = vsyncpa %s8, 0
    %10 = vsyncpa [#allocation6], 0
    %s11 = scalar_lea.sflag [#allocation6], 1
    %12 = vsyncpa %s11, 0
    %13 = vsyncpa [#allocation4], 0
    %s14 = scalar_lea.sflag [#allocation4], 1
    %15 = vsyncpa %s14, 0
    loop: start=0, step=1, limit=4
    $region2: #{tpu_custom_call.1} parent=1 // loop_pre_header
      _
    $region3: #{tpu_custom_call.1} parent=1 // loop_header
      %s17 = sphi 0, %s21
      %p18 = scmp.ge.s32.totalorder %s17, 4
      %s27 = sphi 0, %s29
      %s30 = sphi 0, %s27
      %s31 = sphi 0, %s30
      %s47 = sphi 0, %s31
      %s53 = sphi 0, %s55
      %s56 = sphi 0, %s53
      %s57 = sphi 0, %s56
      %s73 = sphi 0, %s57
      %s79 = sphi 0, %s81
      %s82 = sphi 0, %s79
      %s83 = sphi 0, %s82
      %s99 = sphi 0, %s83
    $region4: #{tpu_custom_call.1} parent=1 // loop_header_branch
      %20 = sbr.rel (%p18) target = $region8
    $region5: #{tpu_custom_call.1} parent=1 // loop_body
      %s22 = ssub.s32 %s17, 1
      %s23 = ssub.s32 %s17, 2
      %s24 = sadd.s32 %s17, 1
      %s25 = ssub.s32 %s17, %s24
      %p26 = scmp.eq.s32.totalorder %s25, 0
      %s28 = sadd.s32 %s27, 1
      %s29 = scalar_select %p26, %s27, %s28
      %p32 = pneg %p26
      %p33 = scmp.eq.s32.totalorder %s17, 1
      %p34 = por %p32, %p33
      %p35 = scmp.ne.s32.totalorder %s27, %s30
      %p36 = scmp.eq.s32.totalorder %s17, 0
      %p37 = por %p35, %p36
      %p38 = scmp.ne.s32.totalorder %s27, %s30
      %p39 = scmp.eq.s32.totalorder %s22, 1
      %p40 = por %p38, %p39
      %p41 = scmp.ne.s32.totalorder %s30, %s31
      %p42 = scmp.eq.s32.totalorder %s22, 0
      %p43 = por %p41, %p42
      %p44 = scmp.ne.s32.totalorder %s30, %s31
      %p45 = scmp.eq.s32.totalorder %s23, 1
      %p46 = por %p44, %p45
      %p48 = scmp.ne.s32.totalorder %s31, %s47
      %p49 = scmp.eq.s32.totalorder %s23, 0
      %p50 = por %p48, %p49
      %s51 = ssub.s32 %s17, %s24
      %p52 = scmp.eq.s32.totalorder %s51, 0
      %s54 = sadd.s32 %s53, 1
      %s55 = scalar_select %p52, %s53, %s54
      %p58 = pneg %p52
      %p59 = scmp.eq.s32.totalorder %s17, 1
      %p60 = por %p58, %p59
      %p61 = scmp.ne.s32.totalorder %s53, %s56
      %p62 = scmp.eq.s32.totalorder %s17, 0
      %p63 = por %p61, %p62
      %p64 = scmp.ne.s32.totalorder %s53, %s56
      %p65 = scmp.eq.s32.totalorder %s22, 1
      %p66 = por %p64, %p65
      %p67 = scmp.ne.s32.totalorder %s56, %s57
      %p68 = scmp.eq.s32.totalorder %s22, 0
      %p69 = por %p67, %p68
      %p70 = scmp.ne.s32.totalorder %s56, %s57
      %p71 = scmp.eq.s32.totalorder %s23, 1
      %p72 = por %p70, %p71
      %p74 = scmp.ne.s32.totalorder %s57, %s73
      %p75 = scmp.eq.s32.totalorder %s23, 0
      %p76 = por %p74, %p75
      %s77 = ssub.s32 %s17, %s24
      %p78 = scmp.eq.s32.totalorder %s77, 0
      %s80 = sadd.s32 %s79, 1
      %s81 = scalar_select %p78, %s79, %s80
      %p84 = pneg %p78
      %p85 = scmp.eq.s32.totalorder %s17, 1
      %p86 = por %p84, %p85
      %p87 = scmp.ne.s32.totalorder %s79, %s82
      %p88 = scmp.eq.s32.totalorder %s17, 0
      %p89 = por %p87, %p88
      %p90 = scmp.ne.s32.totalorder %s79, %s82
      %p91 = scmp.eq.s32.totalorder %s22, 1
      %p92 = por %p90, %p91
      %p93 = scmp.ne.s32.totalorder %s82, %s83
      %p94 = scmp.eq.s32.totalorder %s22, 0
      %p95 = por %p93, %p94
      %p96 = scmp.ne.s32.totalorder %s82, %s83
      %p97 = scmp.eq.s32.totalorder %s23, 1
      %p98 = por %p96, %p97
      %p100 = scmp.ne.s32.totalorder %s83, %s99
      %p101 = scmp.eq.s32.totalorder %s23, 0
      %p102 = por %p100, %p101
      %p103 = scmp.le.s32.totalorder 1, %s17
      %p104 = scmp.lt.s32.totalorder %s17, 3
      %p105 = pnand %p103, %p104
      %p106 = pneg %p105
      // Predicated region
      $region9: #{tpu_custom_call.1} parent=5 // pred_check
        _
      $region10: #{tpu_custom_call.1} parent=5 // pred_check_branch
        %108 = sbr.rel (%p105) target = $region12
      $region11: #{tpu_custom_call.1} parent=5 // pred_region
        %s109 = ssub.s32 %s17, 1
      $region12: #{tpu_custom_call.1} parent=5 // pred_fallthru
        _
      %p110 = scmp.lt.s32.totalorder %s17, 2
      // Predicated region
      $region13: #{tpu_custom_call.1} parent=5 // pred_check
        %p111 = pneg %p110
      $region14: #{tpu_custom_call.1} parent=5 // pred_check_branch
        %113 = sbr.rel (%p111) target = $region16
      $region15: #{tpu_custom_call.1} parent=5 // pred_region
        // Predicated region
        $region17: #{tpu_custom_call.1} parent=15 // pred_check
          %p114 = pneg %p37
        $region18: #{tpu_custom_call.1} parent=15 // pred_check_branch
          %116 = sbr.rel (%p114) target = $region20
        $region19: #{tpu_custom_call.1} parent=15 // pred_region
          %s117 = sand.u32 %s27, 1
          %s118 = scalar_lea.sflag [#allocation3], %s117
          %s119 = sand.u32 %s27, 1
          %s120 = smul.addr %s119, 8
          %s121 = scalar_lea.vmem [#allocation2], %s120
          %s123 = ssub.s32 128, 128
          %124 = vsyncadd %s118, %s123
          %s125 = smul.addr %s17, 128
          %s126 = scalar_lea.hbm %s0, %s125
          %s128 = sshll.u32 %s121, 4
          %s129 = int_to_ptr.vmem [resolvable:$true] %s128
          %131 = dma.hbm_to_vmem [thread:$0]  %s126, 128, %s129, %s118
        $region20: #{tpu_custom_call.1} parent=15 // pred_fallthru
          _
        // Predicated region
        $region21: #{tpu_custom_call.1} parent=15 // pred_check
          %p132 = pneg %p63
        $region22: #{tpu_custom_call.1} parent=15 // pred_check_branch
          %134 = sbr.rel (%p132) target = $region24
        $region23: #{tpu_custom_call.1} parent=15 // pred_region
          %s135 = sand.u32 %s53, 1
          %s136 = scalar_lea.sflag [#allocation6], %s135
          %s137 = sand.u32 %s53, 1
          %s138 = smul.addr %s137, 8
          %s139 = scalar_lea.vmem [#allocation5], %s138
          %s141 = ssub.s32 128, 128
          %142 = vsyncadd %s136, %s141
          %s143 = smul.addr %s17, 128
          %s144 = scalar_lea.hbm %s1, %s143
          %s146 = sshll.u32 %s139, 4
          %s147 = int_to_ptr.vmem [resolvable:$true] %s146
          %149 = dma.hbm_to_vmem [thread:$0]  %s144, 128, %s147, %s136
        $region24: #{tpu_custom_call.1} parent=15 // pred_fallthru
          _
      $region16: #{tpu_custom_call.1} parent=5 // pred_fallthru
        _
      %p150 = scmp.le.s32.totalorder 1, %s17
      %p151 = scmp.lt.s32.totalorder %s17, 3
      %p152 = pnand %p150, %p151
      %p153 = pneg %p152
      // Predicated region
      $region25: #{tpu_custom_call.1} parent=5 // pred_check
        _
      $region26: #{tpu_custom_call.1} parent=5 // pred_check_branch
        %155 = sbr.rel (%p152) target = $region28
      $region27: #{tpu_custom_call.1} parent=5 // pred_region
        %s156 = ssub.s32 %s17, 1
        %s157 = sand.u32 %s30, 1
        %s158 = scalar_lea.sflag [#allocation3], %s157
        %s159 = sand.u32 %s30, 1
        %s160 = smul.addr %s159, 8
        %s161 = scalar_lea.vmem [#allocation2], %s160
        // Predicated region
        $region29: #{tpu_custom_call.1} parent=27 // pred_check
          %p162 = pneg %p43
        $region30: #{tpu_custom_call.1} parent=27 // pred_check_branch
          %164 = sbr.rel (%p162) target = $region32
        $region31: #{tpu_custom_call.1} parent=27 // pred_region
          %165 = dma.done %s158, 128
        $region32: #{tpu_custom_call.1} parent=27 // pred_fallthru
          _
        %s166 = sand.u32 %s56, 1
        %s167 = scalar_lea.sflag [#allocation6], %s166
        %s168 = sand.u32 %s56, 1
        %s169 = smul.addr %s168, 8
        %s170 = scalar_lea.vmem [#allocation5], %s169
        // Predicated region
        $region33: #{tpu_custom_call.1} parent=27 // pred_check
          %p171 = pneg %p69
        $region34: #{tpu_custom_call.1} parent=27 // pred_check_branch
          %173 = sbr.rel (%p171) target = $region36
        $region35: #{tpu_custom_call.1} parent=27 // pred_region
          %174 = dma.done %s167, 128
        $region36: #{tpu_custom_call.1} parent=27 // pred_fallthru
          _
        %s175 = sand.u32 %s30, 1
        %s176 = scalar_lea.sflag [#allocation3], %s175
        %s177 = sand.u32 %s30, 1
        %s178 = smul.addr %s177, 8
        %s179 = scalar_lea.vmem [#allocation2], %s178
        %p180 = pneg %p43
        %p181 = pneg %p40
        %s182 = sand.u32 %s56, 1
        %s183 = scalar_lea.sflag [#allocation6], %s182
        %s184 = sand.u32 %s56, 1
        %s185 = smul.addr %s184, 8
        %s186 = scalar_lea.vmem [#allocation5], %s185
        %p187 = pneg %p69
        %p188 = pneg %p66
        %p189 = pneg %p95
        %p190 = pneg %p92
        %s191 = sand.u32 %s82, 1
        %s192 = scalar_lea.sflag [#allocation4], %s191
        %s193 = sand.u32 %s82, 1
        %s194 = smul.addr %s193, 8
        %s195 = scalar_lea.vmem [#allocation7], %s194
        %v196 = vld [vmem:[%s161] sm:$0xff]
        %v197 = vld [vmem:[%s170] sm:$0xff]
        %v198 = vand.u32 2147483647, %v196
        %v199 = vsub.f32 0.0, %v198
        %v200 = vmul.f32 %v199, 1.442695
        %v201 = vpow.pop %v200
        %v202 = vmax.f32 %v196, 0.0
        %v203 = vmul.f32 %v196, %v197
        %v204 = vsub.f32 %v202, %v203
        %v205 = vadd.f32 %v201, 1.0
        %v206 = vlog2.pop %v205
        %v207 = vmul.f32 %v206, 0.6931472
        %v208 = vmul.f32 -0.5, %v201
        %v209 = vadd.f32 %v208, 1.0
        %v210 = vmul.f32 %v209, %v201
        %v211 = vand.u32 2147483647, %v201
        %vm212 = vcmp.lt.f32.partialorder %v211, 0.0004427343
        %v213 = vsel %vm212, %v210, %v207
        %v214 = vadd.f32 %v204, %v213
        %v215 = vsub.f32 0.0, %v214
        %v216 = vmul.f32 %v215, 1.442695
        %v217 = vpow.pop %v216
        %v218 = vsub.f32 1.0, %v217
        %v219 = vmul.f32 %v214, 0.25
        %v220 = vmul.f32 %v218, %v218
        %v221 = vmul.f32 %v220, %v218
        %v222 = vmul.f32 %v219, %v221
        %v223 = vadd.f32 %v222, 0.0
        %v224 = vadd.f32 %v223, 0.0
        %225 = vst [vmem:[%s195] sm:$0xff] %v224
        %s226 = sand.u32 %s82, 1
        %s227 = scalar_lea.sflag [#allocation4], %s226
        %s228 = sand.u32 %s82, 1
        %s229 = smul.addr %s228, 8
        %s230 = scalar_lea.vmem [#allocation7], %s229
        // Predicated region
        $region37: #{tpu_custom_call.1} parent=27 // pred_check
          %p231 = pneg %p92
        $region38: #{tpu_custom_call.1} parent=27 // pred_check_branch
          %233 = sbr.rel (%p231) target = $region40
        $region39: #{tpu_custom_call.1} parent=27 // pred_region
          %s235 = ssub.s32 128, 128
          %236 = vsyncadd %s227, %s235
          %s237 = smul.addr %s22, 128
          %s238 = scalar_lea.hbm %s2, %s237
          %s240 = sshll.u32 %s230, 4
          %s241 = int_to_ptr.vmem [resolvable:$true] %s240
          %243 = dma.vmem_to_hbm [thread:$0]  %s241, 128, %s238, %s227
        $region40: #{tpu_custom_call.1} parent=27 // pred_fallthru
          _
      $region28: #{tpu_custom_call.1} parent=5 // pred_fallthru
        _
      %p244 = scmp.le.s32.totalorder 2, %s17
      // Predicated region
      $region41: #{tpu_custom_call.1} parent=5 // pred_check
        %p245 = pneg %p244
      $region42: #{tpu_custom_call.1} parent=5 // pred_check_branch
        %247 = sbr.rel (%p245) target = $region44
      $region43: #{tpu_custom_call.1} parent=5 // pred_region
        %s248 = ssub.s32 %s17, 2
        // Predicated region
        $region45: #{tpu_custom_call.1} parent=43 // pred_check
          %p249 = pneg %p98
        $region46: #{tpu_custom_call.1} parent=43 // pred_check_branch
          %251 = sbr.rel (%p249) target = $region48
        $region47: #{tpu_custom_call.1} parent=43 // pred_region
          %s252 = sand.u32 %s83, 1
          %s253 = scalar_lea.sflag [#allocation4], %s252
          %s254 = sand.u32 %s83, 1
          %s255 = smul.addr %s254, 8
          %s256 = scalar_lea.vmem [#allocation7], %s255
          %257 = dma.done %s253, 128
        $region48: #{tpu_custom_call.1} parent=43 // pred_fallthru
          _
      $region44: #{tpu_custom_call.1} parent=5 // pred_fallthru
        _
    $region6: #{tpu_custom_call.1} parent=1 // loop_footer
      %s21 = sadd.s32 1, %s17
    $region7: #{tpu_custom_call.1} parent=1 // loop_footer_branch
      %16 = sbr.rel target = $region3
    $region8: #{tpu_custom_call.1} parent=1 // loop_exit
      _
    %258 = vsyncpa [#allocation3], 1
    %s259 = scalar_lea.sflag [#allocation3], 1
    %260 = vsyncpa %s259, 1
    %261 = vsyncpa [#allocation6], 1
    %s262 = scalar_lea.sflag [#allocation6], 1
    %263 = vsyncpa %s262, 1
    %264 = vsyncpa [#allocation4], 1
    %s265 = scalar_lea.sflag [#allocation4], 1
    %266 = vsyncpa %s265, 1

</llo_original>
